<compile_context>
chip_gen: v7x
topology: tpu7x:2x2x1
jax: 0.10.0
libtpu: 0.0.40
codegen_flags: <defaults>
</compile_context>

<pallas_src>
import math

import jax
import jax.numpy as jnp
from jax.experimental import pallas as pl
from jax.experimental.pallas import tpu as pltpu

_LANE = 128
_TARGET_BLOCK_BYTES = 4 * 1024 * 1024   # per-array block; x(in)+out, double-buffered ~16 MiB
_VMEM_LIMIT_BYTES = 24 * 1024 * 1024    # explicit: > v5e's 16 MiB scoped default, < v7x physical
_MAX_FLAT_L_BYTES = 1 * 1024 * 1024     # cap on lcm-flatten row width (pre-tiled bias + tail pad)


def _add_kernel(x_ref, b_ref, o_ref):
    # b_ref is either (1, tl) (lane bias, shared across row blocks) or (tm, 1)
    # (per-row bias). Single unmasked VPU add per vreg.
    o_ref[...] = x_ref[...] + b_ref[...]


def _sublane_multiple(dtype):
    return {4: 8, 2: 16, 1: 32}.get(jnp.dtype(dtype).itemsize, 8)


def _round_up(v, m):
    return ((v + m - 1) // m) * m


def _row_add(x2d, b2d):
    """out[r, l] = x2d[r, l] + broadcast(b2d); b2d is (1, L) or (R, 1)."""
    R, L = x2d.shape
    itemsize = jnp.dtype(x2d.dtype).itemsize
    sub = _sublane_multiple(x2d.dtype)
    lane_bias = b2d.shape[0] == 1

    # Lane tile: keep one (sub, tl) row group under the block budget. Every
    # caller that can reach the lane-tiled branch hands us L % 128 == 0.
    if sub * L * itemsize <= _TARGET_BLOCK_BYTES or L <= _LANE:
        tl = L
    else:
        tl = max(_LANE, ((_TARGET_BLOCK_BYTES // (sub * itemsize)) // _LANE) * _LANE)
        tl = min(tl, L)

    # Row tile: biggest sublane-aligned tile that keeps one block <= budget.
    tm = _TARGET_BLOCK_BYTES // max(1, tl * itemsize)
    tm = max(sub, (tm // sub) * sub)
    if tm >= R:
        tm = R

    lane_grid = pl.cdiv(L, tl)
    # v7x megacore: never collapse to a 1x1 grid when the rows can be split --
    # give both TensorCores work and the DMA pipeline >= 2 steps.
    if tm == R and lane_grid == 1 and R > sub:
        tm_split = _round_up(pl.cdiv(R, 2), sub)
        if tm_split < R:
            tm = tm_split
    grid = (pl.cdiv(R, tm), pl.cdiv(L, tl))

    if lane_bias:
        b_spec = pl.BlockSpec((1, tl), lambda i, j: (0, j))
    else:
        b_spec = pl.BlockSpec((tm, 1), lambda i, j: (i, 0))

    cost = pl.CostEstimate(
        flops=R * L,
        transcendentals=0,
        bytes_accessed=2 * R * L * itemsize + int(b2d.size) * itemsize,
    )

    return pl.pallas_call(
        _add_kernel,
        out_shape=jax.ShapeDtypeStruct((R, L), x2d.dtype),
        grid=grid,
        in_specs=[pl.BlockSpec((tm, tl), lambda i, j: (i, j)), b_spec],
        out_specs=pl.BlockSpec((tm, tl), lambda i, j: (i, j)),
        compiler_params=pltpu.CompilerParams(
            dimension_semantics=("parallel", "parallel"),
            vmem_limit_bytes=_VMEM_LIMIT_BYTES,
        ),
        cost_estimate=cost,
    )(x2d, b2d)


def _lcm_flat_add(x, pattern, L):
    """out.flat[f] = x.flat[f] + pattern[f % P], via lane-dense (rows, L) flatten.

    L = lcm(P, 128); the flat total is padded (end only) to a multiple of L so
    every row starts on a multiple of P and one pre-tiled (1, L) bias row is
    exact for every block. Pad/slice are cheap XLA ops vs masked-lane DMAs.
    """
    P = pattern.shape[0]
    total = math.prod(x.shape)
    total_pad = _round_up(total, L)
    xf = x.reshape(total)
    if total_pad != total:
        xf = jnp.pad(xf, (0, total_pad - total))
    b_row = jnp.tile(pattern, L // P).reshape(1, L)
    out = _row_add(xf.reshape(total_pad // L, L), b_row).reshape(total_pad)
    if total_pad != total:
        out = out[:total]
    return out.reshape(x.shape)


def add_bias(x, bias_param, *, min_pallas_bytes=0):
    """AddBias forward. bias_param has shape (C, 1) (nn.Parameter(bias.unsqueeze(1))).

    min_pallas_bytes: inputs at or below this size use a plain jnp add (XLA
    fuses it); ~1 MiB is a sensible production default. Default 0 keeps the
    Pallas path active so it is always exercised/verified here.
    """
    bias_vec = bias_param.reshape(-1).astype(x.dtype)  # (C,)
    C = bias_vec.shape[0]
    itemsize = jnp.dtype(x.dtype).itemsize

    if x.ndim == 2:
        if x.nbytes <= min_pallas_bytes:
            return x + bias_vec.reshape(1, C)
        if C % _LANE == 0:
            # Last dim already lane-dense: row/lane-tile directly.
            return _row_add(x, bias_vec.reshape(1, C))
        L = (C * _LANE) // math.gcd(C, _LANE)  # lcm(C, 128)
        if L * itemsize <= _MAX_FLAT_L_BYTES:
            return _lcm_flat_add(x, bias_vec, L)
        # Huge ragged C: pad the channel axis to a lane multiple instead.
        Cp = _round_up(C, _LANE)
        xp = jnp.pad(x, ((0, 0), (0, Cp - C)))
        bp = jnp.pad(bias_vec, (0, Cp - C)).reshape(1, Cp)
        return _row_add(xp, bp)[:, :C]

    if x.ndim == 4:
        N, C4, H, W = x.shape
        if x.nbytes <= min_pallas_bytes:
            return x + bias_vec.reshape(1, C4, 1, 1)
        HW = H * W
        if HW % _LANE == 0:
            # NCHW contiguous -> free reshape to (N*C, H*W); bias is per-row.
            xr = x.reshape(N * C4, HW)
            b_rows = jnp.tile(bias_vec, N).reshape(N * C4, 1)
            return _row_add(xr, b_rows).reshape(N, C4, H, W)
        # Ragged H*W (7x7, 14x14, ...): lane-dense lcm flatten; flat bias
        # pattern over NCHW has period C*H*W with each bias[c] repeated H*W.
        P = C4 * HW
        L = (P * _LANE) // math.gcd(P, _LANE)
        if L * itemsize <= _MAX_FLAT_L_BYTES:
            return _lcm_flat_add(x, jnp.repeat(bias_vec, HW), L)
        # Huge ragged H*W: pad spatial axis to a lane multiple (waste <= 127/HW).
        HWp = _round_up(HW, _LANE)
        xr = jnp.pad(x.reshape(N * C4, HW), ((0, 0), (0, HWp - HW)))
        b_rows = jnp.tile(bias_vec, N).reshape(N * C4, 1)
        return _row_add(xr, b_rows)[:, :HW].reshape(N, C4, H, W)

    raise ValueError(f"AddBias expects 2D or 4D input, got {x.ndim}D")


if __name__ == "__main__":
    key = jax.random.PRNGKey(0)
    k_bias, k_x4, k_x4r, k_x2, k_x2b, k_xw, k_bw = jax.random.split(key, 7)

    C = 4
    # __init__(bias): bias is a (C,) tensor; param is bias.unsqueeze(1) -> (C, 1)
    bias_vec = jax.random.normal(k_bias, (C,), dtype=jnp.float32)
    bias_param = bias_vec[:, None]  # (C, 1)

    # 4D, lane-aligned spatial (H*W = 256): per-row bias path
    x4 = jax.random.normal(k_x4, (2, C, 16, 16), dtype=jnp.float32)
    out4 = jax.block_until_ready(add_bias(x4, bias_param))
    assert out4.shape == x4.shape and out4.dtype == x4.dtype
    assert jnp.allclose(out4, x4 + bias_vec.reshape(1, C, 1, 1), atol=1e-6), "4D mismatch"

    # 4D, ragged spatial (7x7): lcm-flatten lane-dense path
    x4r = jax.random.normal(k_x4r, (2, C, 7, 7), dtype=jnp.float32)
    out4r = jax.block_until_ready(add_bias(x4r, bias_param))
    assert out4r.shape == x4r.shape and out4r.dtype == x4r.dtype
    assert jnp.allclose(out4r, x4r + bias_vec.reshape(1, C, 1, 1), atol=1e-6), "4D ragged mismatch"

    # 2D, small N*C: lcm-flatten with tail pad
    x2 = jax.random.normal(k_x2, (8, C), dtype=jnp.float32)
    out2 = jax.block_until_ready(add_bias(x2, bias_param))
    assert out2.shape == x2.shape and out2.dtype == x2.dtype
    assert jnp.allclose(out2, x2 + bias_vec.reshape(1, C), atol=1e-6), "2D mismatch"

    # 2D, N*C a multiple of 128: lcm-flatten, no pad
    x2b = jax.random.normal(k_x2b, (256, C), dtype=jnp.float32)
    out2b = jax.block_until_ready(add_bias(x2b, bias_param))
    assert out2b.shape == x2b.shape and out2b.dtype == x2b.dtype
    assert jnp.allclose(out2b, x2b + bias_vec.reshape(1, C), atol=1e-6), "2D lane-dense mismatch"

    # 2D, C already a lane multiple: direct path (exercises >=2 row blocks)
    Cw = 128
    bias_w = jax.random.normal(k_bw, (Cw,), dtype=jnp.float32)
    xw = jax.random.normal(k_xw, (64, Cw), dtype=jnp.float32)
    outw = jax.block_until_ready(add_bias(xw, bias_w[:, None]))
    assert outw.shape == xw.shape and outw.dtype == xw.dtype
    assert jnp.allclose(outw, xw + bias_w.reshape(1, Cw), atol=1e-6), "2D wide mismatch"

    print("KERNEL_OK")
</pallas_src>

<mosaic_0001>
module attributes {stable_mosaic.version = 11 : i64} {
  func.func @_add_kernel(%arg0: i32, %arg1: i32, %arg2: memref<8x256xf32, #tpu.memory_space<vmem>>, %arg3: memref<8x1xf32, #tpu.memory_space<vmem>>, %arg4: memref<8x256xf32, #tpu.memory_space<vmem>>) attributes {dimension_semantics = [#tpu.dimension_semantics<parallel>, #tpu.dimension_semantics<parallel>], iteration_bounds = array<i64: 1, 1>, scalar_prefetch = 0 : i64, scratch_operands = 0 : i64, tpu.core_type = #tpu.core_type<tc>, window_params = [{transform_indices = @transform_0, window_bounds = array<i64: 8, 256>}, {transform_indices = @transform_1, window_bounds = array<i64: 8, 1>}, {transform_indices = @transform_2, window_bounds = array<i64: 8, 256>}]} {
    %c0 = arith.constant 0 : index
    %c0_0 = arith.constant 0 : index
    %0 = vector.load %arg2[%c0, %c0_0] : memref<8x256xf32, #tpu.memory_space<vmem>>, vector<8x256xf32>
    %c0_1 = arith.constant 0 : index
    %c0_2 = arith.constant 0 : index
    %1 = vector.load %arg3[%c0_1, %c0_2] : memref<8x1xf32, #tpu.memory_space<vmem>>, vector<8x1xf32>
    %2 = vector.broadcast %1 : vector<8x1xf32> to vector<8x256xf32>
    %3 = arith.addf %0, %2 : vector<8x256xf32>
    %c0_3 = arith.constant 0 : index
    %c0_4 = arith.constant 0 : index
    %4 = vector.load %arg4[%c0_3, %c0_4] : memref<8x256xf32, #tpu.memory_space<vmem>>, vector<8x256xf32>
    tpu.vector_store %arg4[%c0_3, %c0_4], %3 {strides = array<i32>} : memref<8x256xf32, #tpu.memory_space<vmem>>, vector<8x256xf32>,
    return
  }
  func.func @transform_0(%arg0: i32, %arg1: i32) -> (i32, i32) {
    %c0_i32 = arith.constant 0 : i32
    return %arg0, %arg1 : i32, i32
  }
  func.func @transform_1(%arg0: i32, %arg1: i32) -> (i32, i32) {
    %c0_i32 = arith.constant 0 : i32
    %c0_i32_0 = arith.constant 0 : i32
    return %arg0, %c0_i32 : i32, i32
  }
  func.func @transform_2(%arg0: i32, %arg1: i32) -> (i32, i32) {
    %c0_i32 = arith.constant 0 : i32
    return %arg0, %arg1 : i32, i32
  }
}

</mosaic_0001>

<llo_original>
// kernel: tpu_custom_call.1
$region0: #{tpu_custom_call.1}
  #allocation0 [shape = 'u32[]', space=smem, size = 0x4, offset = 0x4, fixed_abs, tag = 'smem constant byte address 0x4 - core index']
  #allocation1 [shape = 'u32[144,128]{1,0:T(1,128)}', space=vmem, size = 0x12000, scoped, tag = 'internal scratch']
  %s0 = inlined_call_operand.hbm [shape: f32[8,256], index: 0, kind: input, shape index: {}]
  %s1 = inlined_call_operand.vmem [shape: f32[8,1], index: 1, kind: input, shape index: {}]
  %s2 = inlined_call_operand.hbm [shape: f32[8,256], index: 2, kind: output, shape index: {}]
  %s3 = sld [smem:[#allocation0]]
  $region22: #{tpu_custom_call.1} parent=0
    _
  %s5 = ssub.s32 1, %s3
  %s6 = scalar_select 0, %s5, %s3
  $region1: #{tpu_custom_call.1} parent=0
    #allocation2 [shape = 'u8[8192]{0}', space=vmem, size = 0x2000, scoped, tag = 'input window, operand 0, single buffered']
    #allocation3 [shape = 's32[1]{0}', space=sflag, size = 0x4, scoped, tag = 'scoped memory for tpu_custom_call.1']
    #allocation4 [shape = 's32[1]{0}', space=sflag, size = 0x4, scoped, tag = 'scoped memory for tpu_custom_call.1']
    #allocation5 [shape = 'u8[8192]{0}', space=vmem, size = 0x2000, scoped, tag = 'output window, operand 0, single buffered']
    %7 = vsyncpa [#allocation3], 0
    %8 = vsyncpa [#allocation4], 0
    // Predicated region
    $region2: #{tpu_custom_call.1} parent=1 // pred_check
      _
    $region3: #{tpu_custom_call.1} parent=1 // pred_check_branch
      %10 = sbr.rel (0) target = $region5
    $region4: #{tpu_custom_call.1} parent=1 // pred_region
      %s12 = ssub.s32 256, 256
      %13 = vsyncadd [#allocation3], %s12
      %s15 = sshll.u32 [#allocation2], 4
      %s16 = int_to_ptr.vmem [resolvable:$true] %s15
      %18 = dma.hbm_to_vmem [thread:$0]  %s0, 256, %s16, [#allocation3]
    $region5: #{tpu_custom_call.1} parent=1 // pred_fallthru
      _
    // Predicated region
    $region6: #{tpu_custom_call.1} parent=1 // pred_check
      _
    $region7: #{tpu_custom_call.1} parent=1 // pred_check_branch
      %20 = sbr.rel (0) target = $region9
    $region8: #{tpu_custom_call.1} parent=1 // pred_region
      _
    $region9: #{tpu_custom_call.1} parent=1 // pred_fallthru
      _
    // Predicated region
    $region10: #{tpu_custom_call.1} parent=1 // pred_check
      _
    $region11: #{tpu_custom_call.1} parent=1 // pred_check_branch
      %22 = sbr.rel (0) target = $region13
    $region12: #{tpu_custom_call.1} parent=1 // pred_region
      %23 = dma.done [#allocation3], 256
    $region13: #{tpu_custom_call.1} parent=1 // pred_fallthru
      _
    %v24 = vld [vmem:[#allocation2] sm:$0xff]
    %v25 = vld [vmem:[#allocation2 + $0x8] sm:$0xff]
    %v26 = vld [vmem:[%s1] sm:$0xff]
    %28 = vset.pattern.permute.xlu0 0
    %29 = vperm.xlu0 %28, %v26
    %v30 = vpop.permute.xlu0 %29
    %v32 = vadd.f32 %v24, %v30
    %v33 = vadd.f32 %v25, %v30
    %34 = vst [vmem:[#allocation5] sm:$0xff] %v32
    %35 = vst [vmem:[#allocation5 + $0x8] sm:$0xff] %v33
    // Predicated region
    $region14: #{tpu_custom_call.1} parent=1 // pred_check
      _
    $region15: #{tpu_custom_call.1} parent=1 // pred_check_branch
      %37 = sbr.rel (0) target = $region17
    $region16: #{tpu_custom_call.1} parent=1 // pred_region
      %s39 = ssub.s32 256, 256
      %40 = vsyncadd [#allocation4], %s39
      %s42 = sshll.u32 [#allocation5], 4
      %s43 = int_to_ptr.vmem [resolvable:$true] %s42
      %45 = dma.vmem_to_hbm [thread:$0]  %s43, 256, %s2, [#allocation4]
    $region17: #{tpu_custom_call.1} parent=1 // pred_fallthru
      _
    // Predicated region
    $region18: #{tpu_custom_call.1} parent=1 // pred_check
      _
    $region19: #{tpu_custom_call.1} parent=1 // pred_check_branch
      %47 = sbr.rel (0) target = $region21
    $region20: #{tpu_custom_call.1} parent=1 // pred_region
      %48 = dma.done [#allocation4], 256
    $region21: #{tpu_custom_call.1} parent=1 // pred_fallthru
      _
    %49 = vsyncpa [#allocation3], 1
    %50 = vsyncpa [#allocation4], 1

</llo_original>
